<compile_context>
chip_gen: v7x
topology: tpu7x:2x2x1
jax: 0.10.0
libtpu: 0.0.40
codegen_flags: <defaults>
</compile_context>

<pallas_src>
import jax
import jax.numpy as jnp
from jax.experimental import pallas as pl
from jax.experimental.pallas import tpu as pltpu

LANE = 128


def value_net_kernel(x_ref, w1_ref, w2_ref, p_ref, v_ref):
    fc1_dims = w1_ref.shape[1]
    fc2_dims = w2_ref.shape[1]
    g, lanes = v_ref.shape[1], v_ref.shape[2]

    # fc1: cast the streamed f32 activations to bf16 in-kernel (VPU has slack),
    # MXU matmul with f32 accumulation, bias + relu in f32.
    x = x_ref[...].astype(w1_ref.dtype)
    h1 = jnp.dot(x, w1_ref[...], preferred_element_type=jnp.float32)
    h1 = jnp.maximum(h1 + p_ref[0:1, :fc1_dims], 0.0)

    # fc2: same recipe.
    h2 = jnp.dot(h1.astype(w2_ref.dtype), w2_ref[...],
                 preferred_element_type=jnp.float32)
    h2 = jnp.maximum(h2 + p_ref[1:2, :fc2_dims], 0.0)

    # Value head (N=1): VPU multiply + XLU lane reduction, MXU stays free.
    # Reshape h2 so the reduction result is already lane-packed (g, 128):
    # batch row r*128 + c of this tile lands at [r, c].
    h2r = h2.reshape(g, lanes, fc2_dims)
    wv = p_ref[2:3, :fc2_dims].reshape(1, 1, fc2_dims)
    v = jnp.sum(h2r * wv, axis=-1) + p_ref[3:4, 0:1]          # (g, 128) f32
    v_ref[...] = v[None].astype(v_ref.dtype)                  # (1, g, 128)


def _round_up(n, m):
    return ((n + m - 1) // m) * m


def value_network_forward(x, w1, b1, w2, b2, wv, bv, *, block_rows=1024):
    """x: (B, in_dim) f32; w1/w2: (in, out); wv: (fc2, 1); b*: biases.

    Returns (B, 1) f32 state values.
    """
    B, in_dim = x.shape
    fc1_dims = w1.shape[1]
    fc2_dims = w2.shape[1]
    assert w1.shape == (in_dim, fc1_dims)
    assert w2.shape == (fc1_dims, fc2_dims)
    assert b1.size == fc1_dims and b2.size == fc2_dims
    # Value-head weight must be the (fc2_dims, 1) column (or flat (fc2_dims,)).
    assert wv.shape in ((fc2_dims, 1), (fc2_dims,)), wv.shape
    assert bv.size == 1

    # Batch tile: multiple of 128 (lane-packed output), large enough to
    # amortize the ~0.35us per-grid-step cost, but capped so the grid has
    # >= 2 steps once B > 128 (keeps both v7x TensorCores busy).
    tb = max(LANE, min(_round_up(block_rows, LANE),
                       _round_up(pl.cdiv(B, 2), LANE)))
    num_blocks = pl.cdiv(B, tb)
    g = tb // LANE

    x = x.astype(jnp.float32)          # streamed as-is; bf16 cast happens in-kernel
    w1_b = w1.astype(jnp.bfloat16)
    w2_b = w2.astype(jnp.bfloat16)

    # Pack the small per-feature params (b1, b2, wv, bv) into one f32 operand.
    maxd = max(fc1_dims, fc2_dims)
    params = jnp.zeros((4, maxd), jnp.float32)
    params = params.at[0, :fc1_dims].set(b1.reshape(-1).astype(jnp.float32))
    params = params.at[1, :fc2_dims].set(b2.reshape(-1).astype(jnp.float32))
    params = params.at[2, :fc2_dims].set(wv.reshape(-1).astype(jnp.float32))
    params = params.at[3, 0].set(bv.reshape(-1)[0].astype(jnp.float32))

    flops = 2 * B * (in_dim * fc1_dims + fc1_dims * fc2_dims + fc2_dims)
    bytes_accessed = (x.size * 4 + w1_b.size * 2 + w2_b.size * 2
                      + params.size * 4 + num_blocks * tb * 4)

    out = pl.pallas_call(
        value_net_kernel,
        out_shape=jax.ShapeDtypeStruct((num_blocks, g, LANE), jnp.float32),
        grid_spec=pltpu.PrefetchScalarGridSpec(
            num_scalar_prefetch=0,
            grid=(num_blocks,),
            in_specs=[
                pl.BlockSpec((tb, in_dim), lambda i: (i, 0)),           # x (pipelined)
                pl.BlockSpec((in_dim, fc1_dims), lambda i: (0, 0)),     # w1 (resident)
                pl.BlockSpec((fc1_dims, fc2_dims), lambda i: (0, 0)),   # w2 (resident)
                pl.BlockSpec((4, maxd), lambda i: (0, 0)),              # b1/b2/wv/bv
            ],
            out_specs=pl.BlockSpec((1, g, LANE), lambda i: (i, 0, 0)),  # packed, lane-dense
        ),
        compiler_params=pltpu.CompilerParams(
            dimension_semantics=("parallel",)),
        cost_estimate=pl.CostEstimate(
            flops=flops, transcendentals=0, bytes_accessed=bytes_accessed),
    )(x, w1_b, w2_b, params)

    # out[i, r, c] is the value of batch row i*tb + r*128 + c; flatten and drop
    # the tail rows (undefined data from the partial last block).
    return out.reshape(num_blocks * tb, 1)[:B]


def init_linear_params(key, in_dim, out_dim):
    """Deterministic PyTorch-style uniform init; weight returned as (in, out)."""
    kw, kb = jax.random.split(key)
    bound = 1.0 / jnp.sqrt(jnp.float32(in_dim))
    w = jax.random.uniform(kw, (in_dim, out_dim), jnp.float32, -bound, bound)
    b = jax.random.uniform(kb, (1, out_dim), jnp.float32, -bound, bound)
    return w, b


if __name__ == "__main__":
    # Small shapes consistent with the module: input_dims=(16,), hidden=128.
    # batch=300 exercises a 2-step grid with a partial tail block.
    batch, in_dim, fc1_dims, fc2_dims = 300, 16, 128, 128

    root = jax.random.PRNGKey(0)
    k_x, k1, k2, k3 = jax.random.split(root, 4)

    x = jax.random.normal(k_x, (batch, in_dim), jnp.float32)
    w1, b1 = init_linear_params(k1, in_dim, fc1_dims)
    w2, b2 = init_linear_params(k2, fc1_dims, fc2_dims)
    wv, bv = init_linear_params(k3, fc2_dims, 1)   # wv: (fc2, 1), bv: (1, 1)

    v = value_network_forward(x, w1, b1, w2, b2, wv, bv)
    v = jax.block_until_ready(v)

    # Pure-JAX reference using the same bf16-input / f32-accumulate recipe.
    h1 = jnp.maximum(
        jnp.dot(x.astype(jnp.bfloat16), w1.astype(jnp.bfloat16),
                preferred_element_type=jnp.float32) + b1.reshape(1, -1), 0.0)
    h2 = jnp.maximum(
        jnp.dot(h1.astype(jnp.bfloat16), w2.astype(jnp.bfloat16),
                preferred_element_type=jnp.float32) + b2.reshape(1, -1), 0.0)
    v_ref = h2 @ wv.reshape(-1, 1) + bv.reshape(1, 1)

    assert v.shape == (batch, 1)
    assert jnp.allclose(v, v_ref, atol=2e-3, rtol=2e-3), \
        float(jnp.max(jnp.abs(v - v_ref)))

    # TODO(synk): the Adam optimizer, checkpoint save/load and device placement
    # are host-side PyTorch state, not part of the forward pass; no Pallas
    # equivalent.
    print("KERNEL_OK")
</pallas_src>

<mosaic_0001>
module attributes {stable_mosaic.version = 11 : i64} {
  func.func @value_net_kernel(%arg0: i32, %arg1: memref<256x16xf32, #tpu.memory_space<vmem>>, %arg2: memref<16x128xbf16, #tpu.memory_space<vmem>>, %arg3: memref<128x128xbf16, #tpu.memory_space<vmem>>, %arg4: memref<4x128xf32, #tpu.memory_space<vmem>>, %arg5: memref<1x2x128xf32, #tpu.memory_space<vmem>>) attributes {dimension_semantics = [#tpu.dimension_semantics<parallel>], iteration_bounds = array<i64: 2>, scalar_prefetch = 0 : i64, scratch_operands = 0 : i64, tpu.core_type = #tpu.core_type<tc>, window_params = [{transform_indices = @transform_0, window_bounds = array<i64: 256, 16>}, {pipeline_mode = #tpu.pipeline_mode<synchronous>, transform_indices = @transform_1, window_bounds = array<i64: 16, 128>}, {pipeline_mode = #tpu.pipeline_mode<synchronous>, transform_indices = @transform_2, window_bounds = array<i64: 128, 128>}, {pipeline_mode = #tpu.pipeline_mode<synchronous>, transform_indices = @transform_3, window_bounds = array<i64: 4, 128>}, {transform_indices = @transform_4, window_bounds = array<i64: 1, 2, 128>}]} {
    %c0 = arith.constant 0 : index
    %c0_0 = arith.constant 0 : index
    %0 = vector.load %arg1[%c0, %c0_0] : memref<256x16xf32, #tpu.memory_space<vmem>>, vector<256x16xf32>
    %1 = arith.truncf %0 : vector<256x16xf32> to vector<256x16xbf16>
    %c0_1 = arith.constant 0 : index
    %c0_2 = arith.constant 0 : index
    %2 = vector.load %arg2[%c0_1, %c0_2] : memref<16x128xbf16, #tpu.memory_space<vmem>>, vector<16x128xbf16>
    %cst = arith.constant dense<0.000000e+00> : vector<256x128xf32>
    %3 = tpu.matmul %1, %2, %cst {dimension_numbers = #tpu.dot_dimension_numbers<[1], [0], [0], [1], [0, 0, 1, 1], [], []>} : vector<256x16xbf16>, vector<16x128xbf16>, vector<256x128xf32> -> vector<256x128xf32>
    %c0_3 = arith.constant 0 : index
    %c0_4 = arith.constant 0 : index
    %4 = vector.load %arg4[%c0_3, %c0_4] : memref<4x128xf32, #tpu.memory_space<vmem>>, vector<1x128xf32>
    %5 = vector.broadcast %4 : vector<1x128xf32> to vector<256x128xf32>
    %6 = arith.addf %3, %5 : vector<256x128xf32>
    %cst_5 = arith.constant 0.000000e+00 : f32
    %7 = vector.broadcast %cst_5 : f32 to vector<256x128xf32>
    %8 = arith.maximumf %6, %7 : vector<256x128xf32>
    %9 = arith.truncf %8 : vector<256x128xf32> to vector<256x128xbf16>
    %c0_6 = arith.constant 0 : index
    %c0_7 = arith.constant 0 : index
    %10 = vector.load %arg3[%c0_6, %c0_7] : memref<128x128xbf16, #tpu.memory_space<vmem>>, vector<128x128xbf16>
    %cst_8 = arith.constant dense<0.000000e+00> : vector<256x128xf32>
    %11 = tpu.matmul %9, %10, %cst_8 {dimension_numbers = #tpu.dot_dimension_numbers<[1], [0], [0], [1], [0, 0, 1, 1], [], []>} : vector<256x128xbf16>, vector<128x128xbf16>, vector<256x128xf32> -> vector<256x128xf32>
    %c1 = arith.constant 1 : index
    %c0_9 = arith.constant 0 : index
    %12 = vector.load %arg4[%c1, %c0_9] : memref<4x128xf32, #tpu.memory_space<vmem>>, vector<1x128xf32>
    %13 = vector.broadcast %12 : vector<1x128xf32> to vector<256x128xf32>
    %14 = arith.addf %11, %13 : vector<256x128xf32>
    %cst_10 = arith.constant 0.000000e+00 : f32
    %15 = vector.broadcast %cst_10 : f32 to vector<256x128xf32>
    %16 = arith.maximumf %14, %15 : vector<256x128xf32>
    %17 = vector.shape_cast %16 : vector<256x128xf32> to vector<2x128x128xf32>
    %c2 = arith.constant 2 : index
    %c0_11 = arith.constant 0 : index
    %18 = vector.load %arg4[%c2, %c0_11] : memref<4x128xf32, #tpu.memory_space<vmem>>, vector<1x128xf32>
    %19 = vector.shape_cast %18 : vector<1x128xf32> to vector<1x1x128xf32>
    %20 = vector.broadcast %19 : vector<1x1x128xf32> to vector<2x128x128xf32>
    %21 = arith.mulf %17, %20 : vector<2x128x128xf32>
    %cst_12 = arith.constant dense<0.000000e+00> : vector<2x128xf32>
    %22 = vector.multi_reduction <add>, %21, %cst_12 [2] : vector<2x128x128xf32> to vector<2x128xf32>
    %c3 = arith.constant 3 : index
    %c0_13 = arith.constant 0 : index
    %23 = vector.load %arg4[%c3, %c0_13] : memref<4x128xf32, #tpu.memory_space<vmem>>, vector<1x1xf32>
    %24 = vector.broadcast %23 : vector<1x1xf32> to vector<2x128xf32>
    %25 = arith.addf %22, %24 : vector<2x128xf32>
    %26 = vector.shape_cast %25 : vector<2x128xf32> to vector<1x2x128xf32>
    %c0_14 = arith.constant 0 : index
    %c0_15 = arith.constant 0 : index
    %c0_16 = arith.constant 0 : index
    %27 = vector.load %arg5[%c0_14, %c0_15, %c0_16] : memref<1x2x128xf32, #tpu.memory_space<vmem>>, vector<1x2x128xf32>
    tpu.vector_store %arg5[%c0_14, %c0_15, %c0_16], %26 {strides = array<i32>} : memref<1x2x128xf32, #tpu.memory_space<vmem>>, vector<1x2x128xf32>,
    return
  }
  func.func @transform_0(%arg0: i32) -> (i32, i32) {
    %c0_i32 = arith.constant 0 : i32
    %c0_i32_0 = arith.constant 0 : i32
    return %arg0, %c0_i32 : i32, i32
  }
  func.func @transform_1(%arg0: i32) -> (i32, i32) {
    %c0_i32 = arith.constant 0 : i32
    %c0_i32_0 = arith.constant 0 : i32
    %c0_i32_1 = arith.constant 0 : i32
    return %c0_i32, %c0_i32_0 : i32, i32
  }
  func.func @transform_2(%arg0: i32) -> (i32, i32) {
    %c0_i32 = arith.constant 0 : i32
    %c0_i32_0 = arith.constant 0 : i32
    %c0_i32_1 = arith.constant 0 : i32
    return %c0_i32, %c0_i32_0 : i32, i32
  }
  func.func @transform_3(%arg0: i32) -> (i32, i32) {
    %c0_i32 = arith.constant 0 : i32
    %c0_i32_0 = arith.constant 0 : i32
    %c0_i32_1 = arith.constant 0 : i32
    return %c0_i32, %c0_i32_0 : i32, i32
  }
  func.func @transform_4(%arg0: i32) -> (i32, i32, i32) {
    %c0_i32 = arith.constant 0 : i32
    %c0_i32_0 = arith.constant 0 : i32
    %c0_i32_1 = arith.constant 0 : i32
    return %arg0, %c0_i32, %c0_i32_0 : i32, i32, i32
  }
}

</mosaic_0001>

<llo_original>
// kernel: tpu_custom_call.1
$region0: #{tpu_custom_call.1}
  #allocation0 [shape = 'u32[]', space=smem, size = 0x4, offset = 0x4, fixed_abs, tag = 'smem constant byte address 0x4 - core index']
  #allocation1 [shape = 'u32[144,128]{1,0:T(1,128)}', space=vmem, size = 0x12000, scoped, tag = 'internal scratch']
  %s0 = inlined_call_operand.vmem [shape: f32[300,16], index: 0, kind: input, shape index: {}]
  %s1 = inlined_call_operand.vmem [shape: bf16[16,128], index: 1, kind: input, shape index: {}]
  %s2 = inlined_call_operand.vmem [shape: bf16[128,128], index: 2, kind: input, shape index: {}]
  %s3 = inlined_call_operand.vmem [shape: f32[4,128], index: 3, kind: input, shape index: {}]
  %s4 = inlined_call_operand.hbm [shape: f32[2,2,128], index: 4, kind: output, shape index: {}]
  %s5 = sld [smem:[#allocation0]]
  $region49: #{tpu_custom_call.1} parent=0
    _
  %s7 = ssub.s32 1, %s5
  %s8 = scalar_select 0, %s7, %s5
  $region1: #{tpu_custom_call.1} parent=0
    #allocation2 [shape = 'u8[2048]{0}', space=vmem, size = 0x800, scoped, tag = 'output window, operand 0']
    #allocation3 [shape = 's32[2]{0}', space=sflag, size = 0x8, scoped, tag = 'scoped memory for tpu_custom_call.1']
    %9 = vsyncpa [#allocation3], 0
    %s10 = scalar_lea.sflag [#allocation3], 1
    %11 = vsyncpa %s10, 0
    loop: start=0, step=1, limit=4
    $region2: #{tpu_custom_call.1} parent=1 // loop_pre_header
      _
    $region3: #{tpu_custom_call.1} parent=1 // loop_header
      %s13 = sphi 0, %s17
      %p14 = scmp.ge.s32.totalorder %s13, 4
      %s23 = sphi 0, %s25
      %s26 = sphi 0, %s23
      %s27 = sphi 0, %s26
      %s43 = sphi 0, %s27
      %s47 = sphi 0, %s47
      %s49 = sphi 0, %s47
      %s50 = sphi 0, %s49
      %s64 = sphi 0, %s50
      %s68 = sphi 0, %s68
      %s70 = sphi 0, %s68
      %s71 = sphi 0, %s70
      %s85 = sphi 0, %s71
      %s89 = sphi 0, %s89
      %s91 = sphi 0, %s89
      %s92 = sphi 0, %s91
      %s106 = sphi 0, %s92
      %s112 = sphi 0, %s114
      %s115 = sphi 0, %s112
      %s116 = sphi 0, %s115
      %s132 = sphi 0, %s116
    $region4: #{tpu_custom_call.1} parent=1 // loop_header_branch
      %16 = sbr.rel (%p14) target = $region8
    $region5: #{tpu_custom_call.1} parent=1 // loop_body
      %s18 = ssub.s32 %s13, 1
      %s19 = ssub.s32 %s13, 2
      %s20 = sadd.s32 %s13, 1
      %s21 = ssub.s32 %s13, %s20
      %p22 = scmp.eq.s32.totalorder %s21, 0
      %s24 = sadd.s32 %s23, 1
      %s25 = scalar_select %p22, %s23, %s24
      %p28 = pneg %p22
      %p29 = scmp.eq.s32.totalorder %s13, 1
      %p30 = por %p28, %p29
      %p31 = scmp.ne.s32.totalorder %s23, %s26
      %p32 = scmp.eq.s32.totalorder %s13, 0
      %p33 = por %p31, %p32
      %p34 = scmp.ne.s32.totalorder %s23, %s26
      %p35 = scmp.eq.s32.totalorder %s18, 1
      %p36 = por %p34, %p35
      %p37 = scmp.ne.s32.totalorder %s26, %s27
      %p38 = scmp.eq.s32.totalorder %s18, 0
      %p39 = por %p37, %p38
      %p40 = scmp.ne.s32.totalorder %s26, %s27
      %p41 = scmp.eq.s32.totalorder %s19, 1
      %p42 = por %p40, %p41
      %p44 = scmp.ne.s32.totalorder %s27, %s43
      %p45 = scmp.eq.s32.totalorder %s19, 0
      %p46 = por %p44, %p45
      %s48 = sadd.s32 %s47, 1
      %p51 = scmp.eq.s32.totalorder %s13, 1
      %p52 = scmp.ne.s32.totalorder %s47, %s49
      %p53 = scmp.eq.s32.totalorder %s13, 0
      %p54 = por %p52, %p53
      %p55 = scmp.ne.s32.totalorder %s47, %s49
      %p56 = scmp.eq.s32.totalorder %s18, 1
      %p57 = por %p55, %p56
      %p58 = scmp.ne.s32.totalorder %s49, %s50
      %p59 = scmp.eq.s32.totalorder %s18, 0
      %p60 = por %p58, %p59
      %p61 = scmp.ne.s32.totalorder %s49, %s50
      %p62 = scmp.eq.s32.totalorder %s19, 1
      %p63 = por %p61, %p62
      %p65 = scmp.ne.s32.totalorder %s50, %s64
      %p66 = scmp.eq.s32.totalorder %s19, 0
      %p67 = por %p65, %p66
      %s69 = sadd.s32 %s68, 1
      %p72 = scmp.eq.s32.totalorder %s13, 1
      %p73 = scmp.ne.s32.totalorder %s68, %s70
      %p74 = scmp.eq.s32.totalorder %s13, 0
      %p75 = por %p73, %p74
      %p76 = scmp.ne.s32.totalorder %s68, %s70
      %p77 = scmp.eq.s32.totalorder %s18, 1
      %p78 = por %p76, %p77
      %p79 = scmp.ne.s32.totalorder %s70, %s71
      %p80 = scmp.eq.s32.totalorder %s18, 0
      %p81 = por %p79, %p80
      %p82 = scmp.ne.s32.totalorder %s70, %s71
      %p83 = scmp.eq.s32.totalorder %s19, 1
      %p84 = por %p82, %p83
      %p86 = scmp.ne.s32.totalorder %s71, %s85
      %p87 = scmp.eq.s32.totalorder %s19, 0
      %p88 = por %p86, %p87
      %s90 = sadd.s32 %s89, 1
      %p93 = scmp.eq.s32.totalorder %s13, 1
      %p94 = scmp.ne.s32.totalorder %s89, %s91
      %p95 = scmp.eq.s32.totalorder %s13, 0
      %p96 = por %p94, %p95
      %p97 = scmp.ne.s32.totalorder %s89, %s91
      %p98 = scmp.eq.s32.totalorder %s18, 1
      %p99 = por %p97, %p98
      %p100 = scmp.ne.s32.totalorder %s91, %s92
      %p101 = scmp.eq.s32.totalorder %s18, 0
      %p102 = por %p100, %p101
      %p103 = scmp.ne.s32.totalorder %s91, %s92
      %p104 = scmp.eq.s32.totalorder %s19, 1
      %p105 = por %p103, %p104
      %p107 = scmp.ne.s32.totalorder %s92, %s106
      %p108 = scmp.eq.s32.totalorder %s19, 0
      %p109 = por %p107, %p108
      %s110 = ssub.s32 %s13, %s20
      %p111 = scmp.eq.s32.totalorder %s110, 0
      %s113 = sadd.s32 %s112, 1
      %s114 = scalar_select %p111, %s112, %s113
      %p117 = pneg %p111
      %p118 = scmp.eq.s32.totalorder %s13, 1
      %p119 = por %p117, %p118
      %p120 = scmp.ne.s32.totalorder %s112, %s115
      %p121 = scmp.eq.s32.totalorder %s13, 0
      %p122 = por %p120, %p121
      %p123 = scmp.ne.s32.totalorder %s112, %s115
      %p124 = scmp.eq.s32.totalorder %s18, 1
      %p125 = por %p123, %p124
      %p126 = scmp.ne.s32.totalorder %s115, %s116
      %p127 = scmp.eq.s32.totalorder %s18, 0
      %p128 = por %p126, %p127
      %p129 = scmp.ne.s32.totalorder %s115, %s116
      %p130 = scmp.eq.s32.totalorder %s19, 1
      %p131 = por %p129, %p130
      %p133 = scmp.ne.s32.totalorder %s116, %s132
      %p134 = scmp.eq.s32.totalorder %s19, 0
      %p135 = por %p133, %p134
      %p136 = scmp.le.s32.totalorder 1, %s13
      %p137 = scmp.lt.s32.totalorder %s13, 3
      %p138 = pnand %p136, %p137
      %p139 = pneg %p138
      // Predicated region
      $region9: #{tpu_custom_call.1} parent=5 // pred_check
        _
      $region10: #{tpu_custom_call.1} parent=5 // pred_check_branch
        %141 = sbr.rel (%p138) target = $region12
      $region11: #{tpu_custom_call.1} parent=5 // pred_region
        %s142 = ssub.s32 %s13, 1
        // Predicated region
        $region13: #{tpu_custom_call.1} parent=11 // pred_check
          %p143 = pneg %p60
        $region14: #{tpu_custom_call.1} parent=11 // pred_check_branch
          %145 = sbr.rel (%p143) target = $region16
        $region15: #{tpu_custom_call.1} parent=11 // pred_region
          _
        $region16: #{tpu_custom_call.1} parent=11 // pred_fallthru
          _
        // Predicated region
        $region17: #{tpu_custom_call.1} parent=11 // pred_check
          %p146 = pneg %p81
        $region18: #{tpu_custom_call.1} parent=11 // pred_check_branch
          %148 = sbr.rel (%p146) target = $region20
        $region19: #{tpu_custom_call.1} parent=11 // pred_region
          _
        $region20: #{tpu_custom_call.1} parent=11 // pred_fallthru
          _
        // Predicated region
        $region21: #{tpu_custom_call.1} parent=11 // pred_check
          %p149 = pneg %p102
        $region22: #{tpu_custom_call.1} parent=11 // pred_check_branch
          %151 = sbr.rel (%p149) target = $region24
        $region23: #{tpu_custom_call.1} parent=11 // pred_region
          _
        $region24: #{tpu_custom_call.1} parent=11 // pred_fallthru
          _
      $region12: #{tpu_custom_call.1} parent=5 // pred_fallthru
        _
      %p152 = scmp.lt.s32.totalorder %s13, 2
      // Predicated region
      $region25: #{tpu_custom_call.1} parent=5 // pred_check
        %p153 = pneg %p152
      $region26: #{tpu_custom_call.1} parent=5 // pred_check_branch
        %155 = sbr.rel (%p153) target = $region28
      $region27: #{tpu_custom_call.1} parent=5 // pred_region
        // Predicated region
        $region29: #{tpu_custom_call.1} parent=27 // pred_check
          %p156 = pneg %p33
        $region30: #{tpu_custom_call.1} parent=27 // pred_check_branch
          %158 = sbr.rel (%p156) target = $region32
        $region31: #{tpu_custom_call.1} parent=27 // pred_region
          %s159 = smul.u32 32, %s13
          %s160 = ssub.s32 38, %s159
          %p161 = scmp.lt.s32.totalorder %s160, 32
          %s162 = scalar_select %p161, %s160, 32
          %s163 = smul.u32 128, %s162
          %p164 = scmp.lt.s32.totalorder %s159, 37
          %s165 = scalar_select %p164, %s159, 37
          %s166 = smul.addr %s165, 8
          %s167 = scalar_lea.vmem %s0, %s166
          %s168 = smul.u32 32, %s13
          %s169 = ssub.s32 38, %s168
          %p170 = scmp.lt.s32.totalorder %s169, 32
          %s171 = scalar_select %p170, %s169, 32
          %s172 = smul.u32 128, %s171
        $region32: #{tpu_custom_call.1} parent=27 // pred_fallthru
          _
      $region28: #{tpu_custom_call.1} parent=5 // pred_fallthru
        _
      %p173 = scmp.le.s32.totalorder 1, %s13
      %p174 = scmp.lt.s32.totalorder %s13, 3
      %p175 = pnand %p173, %p174
      %p176 = pneg %p175
      // Predicated region
      $region33: #{tpu_custom_call.1} parent=5 // pred_check
        _
      $region34: #{tpu_custom_call.1} parent=5 // pred_check_branch
        %178 = sbr.rel (%p175) target = $region36
      $region35: #{tpu_custom_call.1} parent=5 // pred_region
        %s179 = ssub.s32 %s13, 1
        %s180 = smul.u32 32, %s18
        %s181 = ssub.s32 38, %s180
        %p182 = scmp.lt.s32.totalorder %s181, 32
        %s183 = scalar_select %p182, %s181, 32
        %s184 = smul.u32 128, %s183
        %p185 = scmp.lt.s32.totalorder %s180, 37
        %s186 = scalar_select %p185, %s180, 37
        %s187 = smul.addr %s186, 8
        %s188 = scalar_lea.vmem %s0, %s187
        %p189 = pneg %p39
        %p190 = pneg %p36
        %p191 = pneg %p60
        %p192 = pneg %p57
        %p193 = pneg %p81
        %p194 = pneg %p78
        %p195 = pneg %p102
        %p196 = pneg %p99
        %p197 = pneg %p128
        %p198 = pneg %p125
        %s199 = sand.u32 %s115, 1
        %s200 = scalar_lea.sflag [#allocation3], %s199
        %s201 = sand.u32 %s115, 1
        %s202 = smul.addr %s201, 2
        %s203 = scalar_lea.vmem [#allocation2], %s202
        %s204 = smul.u32 32, %s18
        %s205 = ssub.s32 38, %s204
        %p206 = scmp.lt.s32.totalorder %s205, 32
        %s207 = scalar_select %p206, %s205, 32
        %s208 = smul.u32 128, %s207
        %p209 = scmp.lt.s32.totalorder %s204, 37
        %s210 = scalar_select %p209, %s204, 37
        %s211 = smul.addr %s210, 8
        %s212 = scalar_lea.vmem %s0, %s211
        %s213 = smul.u32 32, %s18
        %s214 = ssub.s32 38, %s213
        %p215 = scmp.lt.s32.totalorder %s214, 32
        %s216 = scalar_select %p215, %s214, 32
        %s217 = smul.u32 128, %s216
        %v219 = vld [vmem:[%s212] sm:$0xff]
        %v220 = vld [vmem:[%s212 + $0x8] sm:$0xff]
        %v221 = vld [vmem:[%s212 + $0x10] sm:$0xff]
        %v222 = vld [vmem:[%s212 + $0x18] sm:$0xff]
        %v223 = vld [vmem:[%s212 + $0x20] sm:$0xff]
        %v224 = vld [vmem:[%s212 + $0x28] sm:$0xff]
        %v225 = vld [vmem:[%s212 + $0x30] sm:$0xff]
        %v226 = vld [vmem:[%s212 + $0x38] sm:$0xff]
        %v227 = vld [vmem:[%s212 + $0x40] sm:$0xff]
        %v228 = vld [vmem:[%s212 + $0x48] sm:$0xff]
        %v229 = vld [vmem:[%s212 + $0x50] sm:$0xff]
        %v230 = vld [vmem:[%s212 + $0x58] sm:$0xff]
        %v231 = vld [vmem:[%s212 + $0x60] sm:$0xff]
        %v232 = vld [vmem:[%s212 + $0x68] sm:$0xff]
        %v233 = vld [vmem:[%s212 + $0x70] sm:$0xff]
        %v234 = vld [vmem:[%s212 + $0x78] sm:$0xff]
        %v235 = vld [vmem:[%s212 + $0x80] sm:$0xff]
        %v236 = vld [vmem:[%s212 + $0x88] sm:$0xff]
        %v237 = vld [vmem:[%s212 + $0x90] sm:$0xff]
        %v238 = vld [vmem:[%s212 + $0x98] sm:$0xff]
        %v239 = vld [vmem:[%s212 + $0xa0] sm:$0xff]
        %v240 = vld [vmem:[%s212 + $0xa8] sm:$0xff]
        %v241 = vld [vmem:[%s212 + $0xb0] sm:$0xff]
        %v242 = vld [vmem:[%s212 + $0xb8] sm:$0xff]
        %v243 = vld [vmem:[%s212 + $0xc0] sm:$0xff]
        %v244 = vld [vmem:[%s212 + $0xc8] sm:$0xff]
        %v245 = vld [vmem:[%s212 + $0xd0] sm:$0xff]
        %v246 = vld [vmem:[%s212 + $0xd8] sm:$0xff]
        %v247 = vld [vmem:[%s212 + $0xe0] sm:$0xff]
        %v248 = vld [vmem:[%s212 + $0xe8] sm:$0xff]
        %v249 = vld [vmem:[%s212 + $0xf0] sm:$0xff]
        %v250 = vld [vmem:[%s212 + $0xf8] sm:$0xff]
        %v251 = vpack.c.bf16 %v220, %v219
        %v252 = vpack.c.bf16 %v222, %v221
        %v253 = vpack.c.bf16 %v224, %v223
        %v254 = vpack.c.bf16 %v226, %v225
        %v255 = vpack.c.bf16 %v228, %v227
        %v256 = vpack.c.bf16 %v230, %v229
        %v257 = vpack.c.bf16 %v232, %v231
        %v258 = vpack.c.bf16 %v234, %v233
        %v259 = vpack.c.bf16 %v236, %v235
        %v260 = vpack.c.bf16 %v238, %v237
        %v261 = vpack.c.bf16 %v240, %v239
        %v262 = vpack.c.bf16 %v242, %v241
        %v263 = vpack.c.bf16 %v244, %v243
        %v264 = vpack.c.bf16 %v246, %v245
        %v265 = vpack.c.bf16 %v248, %v247
        %v266 = vpack.c.bf16 %v250, %v249
        %v267 = vld [vmem:[%s1] sm:$0xf]
        %v268 = vld [vmem:[%s1 + $0x4] sm:$0xf]
        %v269 = vld [vmem:[%s3] sm:$0x1]
        %v270 = vlaneseq
        %v271 = vshrl.u32 %v270, 7
        %v272 = vsub.s32 0, %v271
        %v273 = vrot.slane %v269, %v272
        %v276 = vunpack.c.l.b16 %v267
        %v277 = vunpack.c.l.b16 %v268
        %v278 = vpack.c.b16 %v277, %v276
        %vm280 = vcmask 130048
        %v282 = vsel %vm280, %v251, 0
        %v285 = vsel %vm280, %v252, 0
        %v288 = vsel %vm280, %v253, 0
        %v291 = vsel %vm280, %v254, 0
        %v294 = vsel %vm280, %v255, 0
        %v297 = vsel %vm280, %v256, 0
        %v300 = vsel %vm280, %v257, 0
        %v303 = vsel %vm280, %v258, 0
        %v306 = vsel %vm280, %v259, 0
        %v309 = vsel %vm280, %v260, 0
        %v312 = vsel %vm280, %v261, 0
        %v315 = vsel %vm280, %v262, 0
        %v318 = vsel %vm280, %v263, 0
        %v321 = vsel %vm280, %v264, 0
        %v324 = vsel %vm280, %v265, 0
        %v327 = vsel %vm280, %v266, 0
        %329 = vmatprep.subr.bf16.mxu0 0
        %330 = vmatpush1.bf16.msra.mxu0 %v278
        %331 = vmatprep.subr.bf16.mxu0 0
        %332 = vmatpush1.bf16.msra.mxu0 0
        %333 = vmatprep.subr.bf16.mxu0 0
        %334 = vmatpush1.bf16.msra.mxu0 0
        %335 = vmatprep.subr.bf16.mxu0 0
        %336 = vmatpush1.bf16.msra.mxu0 0
        %337 = vmatprep.subr.bf16.mxu0 0
        %338 = vmatpush1.bf16.msra.mxu0 0
        %339 = vmatprep.subr.bf16.mxu0 0
        %340 = vmatpush1.bf16.msra.mxu0 0
        %341 = vmatprep.subr.bf16.mxu0 0
        %342 = vmatpush1.bf16.msra.mxu0 0
        %343 = vmatprep.subr.bf16.mxu0 0
        %344 = vmatpush1.bf16.msra.mxu0 0
        %345 = vmatprep.subr.bf16.mxu0 0
        %346 = vmatpush1.bf16.msra.mxu0 0
        %347 = vmatprep.subr.bf16.mxu0 0
        %348 = vmatpush1.bf16.msra.mxu0 0
        %349 = vmatprep.subr.bf16.mxu0 0
        %350 = vmatpush1.bf16.msra.mxu0 0
        %351 = vmatprep.subr.bf16.mxu0 0
        %352 = vmatpush1.bf16.msra.mxu0 0
        %353 = vmatprep.subr.bf16.mxu0 0
        %354 = vmatpush1.bf16.msra.mxu0 0
        %355 = vmatprep.subr.bf16.mxu0 0
        %356 = vmatpush1.bf16.msra.mxu0 0
        %357 = vmatprep.subr.bf16.mxu0 0
        %358 = vmatpush1.bf16.msra.mxu0 0
        %359 = vmatprep.subr.bf16.mxu0 0
        %360 = vmatpush1.bf16.msra.mxu0 0
        %361 = vmatprep.mubr.bf16.mxu0 0
        %362 = vmatmul.mubr.bf16.gmra.mrb[0].mxu0 %v282
        %v363 = vpop.f32.mrb[0].mxu0
        %v364 = vadd.f32 %v273, %v363
        %v365 = vpop.f32.mrb[0].mxu0
        %v366 = vpop.f32.mrb[0].mxu0
        %v367 = vadd.f32 %v273, %v366
        %v368 = vpop.f32.mrb[0].mxu0
        %369 = vmatprep.mubr.bf16.mxu0 0
        %370 = vmatmul.mubr.bf16.gmra.mrb[0].mxu0 %v285
        %v371 = vpop.f32.mrb[0].mxu0
        %v372 = vadd.f32 %v273, %v371
        %v373 = vpop.f32.mrb[0].mxu0
        %v374 = vpop.f32.mrb[0].mxu0
        %v375 = vadd.f32 %v273, %v374
        %v376 = vpop.f32.mrb[0].mxu0
        %377 = vmatprep.mubr.bf16.mxu0 0
        %378 = vmatmul.mubr.bf16.gmra.mrb[0].mxu0 %v288
        %v379 = vpop.f32.mrb[0].mxu0
        %v380 = vadd.f32 %v273, %v379
        %v381 = vpop.f32.mrb[0].mxu0
        %v382 = vpop.f32.mrb[0].mxu0
        %v383 = vadd.f32 %v273, %v382
        %v384 = vpop.f32.mrb[0].mxu0
        %385 = vmatprep.mubr.bf16.mxu0 0
        %386 = vmatmul.mubr.bf16.gmra.mrb[0].mxu0 %v291
        %v387 = vpop.f32.mrb[0].mxu0
        %v388 = vadd.f32 %v273, %v387
        %v389 = vpop.f32.mrb[0].mxu0
        %v390 = vpop.f32.mrb[0].mxu0
        %v391 = vadd.f32 %v273, %v390
        %v392 = vpop.f32.mrb[0].mxu0
        %393 = vmatprep.mubr.bf16.mxu0 0
        %394 = vmatmul.mubr.bf16.gmra.mrb[0].mxu0 %v294
        %v395 = vpop.f32.mrb[0].mxu0
        %v396 = vadd.f32 %v273, %v395
        %v397 = vpop.f32.mrb[0].mxu0
        %v398 = vpop.f32.mrb[0].mxu0
        %v399 = vadd.f32 %v273, %v398
        %v400 = vpop.f32.mrb[0].mxu0
        %401 = vmatprep.mubr.bf16.mxu0 0
        %402 = vmatmul.mubr.bf16.gmra.mrb[0].mxu0 %v297
        %v403 = vpop.f32.mrb[0].mxu0
        %v404 = vadd.f32 %v273, %v403
        %v405 = vpop.f32.mrb[0].mxu0
        %v406 = vpop.f32.mrb[0].mxu0
        %v407 = vadd.f32 %v273, %v406
        %v408 = vpop.f32.mrb[0].mxu0
        %409 = vmatprep.mubr.bf16.mxu0 0
        %410 = vmatmul.mubr.bf16.gmra.mrb[0].mxu0 %v300
        %v411 = vpop.f32.mrb[0].mxu0
        %v412 = vadd.f32 %v273, %v411
        %v413 = vpop.f32.mrb[0].mxu0
        %v414 = vpop.f32.mrb[0].mxu0
        %v415 = vadd.f32 %v273, %v414
        %v416 = vpop.f32.mrb[0].mxu0
        %417 = vmatprep.mubr.bf16.mxu0 0
        %418 = vmatmul.mubr.bf16.gmra.mrb[0].mxu0 %v303
        %v419 = vpop.f32.mrb[0].mxu0
        %v420 = vadd.f32 %v273, %v419
        %v421 = vpop.f32.mrb[0].mxu0
        %v422 = vpop.f32.mrb[0].mxu0
        %v423 = vadd.f32 %v273, %v422
        %v424 = vpop.f32.mrb[0].mxu0
        %425 = vmatprep.mubr.bf16.mxu0 0
        %426 = vmatmul.mubr.bf16.gmra.mrb[0].mxu0 %v306
        %v427 = vpop.f32.mrb[0].mxu0
        %v428 = vadd.f32 %v273, %v427
        %v429 = vpop.f32.mrb[0].mxu0
        %v430 = vpop.f32.mrb[0].mxu0
        %v431 = vadd.f32 %v273, %v430
        %v432 = vpop.f32.mrb[0].mxu0
        %433 = vmatprep.mubr.bf16.mxu0 0
        %434 = vmatmul.mubr.bf16.gmra.mrb[0].mxu0 %v309
        %v435 = vpop.f32.mrb[0].mxu0
        %v436 = vadd.f32 %v273, %v435
        %v437 = vpop.f32.mrb[0].mxu0
        %v438 = vpop.f32.mrb[0].mxu0
        %v439 = vadd.f32 %v273, %v438
        %v440 = vpop.f32.mrb[0].mxu0
        %441 = vmatprep.mubr.bf16.mxu0 0
        %442 = vmatmul.mubr.bf16.gmra.mrb[0].mxu0 %v312
        %v443 = vpop.f32.mrb[0].mxu0
        %v444 = vadd.f32 %v273, %v443
        %v445 = vpop.f32.mrb[0].mxu0
        %v446 = vpop.f32.mrb[0].mxu0
        %v447 = vadd.f32 %v273, %v446
        %v448 = vpop.f32.mrb[0].mxu0
        %449 = vmatprep.mubr.bf16.mxu0 0
        %450 = vmatmul.mubr.bf16.gmra.mrb[0].mxu0 %v315
        %v451 = vpop.f32.mrb[0].mxu0
        %v452 = vadd.f32 %v273, %v451
        %v453 = vpop.f32.mrb[0].mxu0
        %v454 = vpop.f32.mrb[0].mxu0
        %v455 = vadd.f32 %v273, %v454
        %v456 = vpop.f32.mrb[0].mxu0
        %457 = vmatprep.mubr.bf16.mxu0 0
        %458 = vmatmul.mubr.bf16.gmra.mrb[0].mxu0 %v318
        %v459 = vpop.f32.mrb[0].mxu0
        %v460 = vadd.f32 %v273, %v459
        %v461 = vpop.f32.mrb[0].mxu0
        %v462 = vpop.f32.mrb[0].mxu0
        %v463 = vadd.f32 %v273, %v462
        %v464 = vpop.f32.mrb[0].mxu0
        %465 = vmatprep.mubr.bf16.mxu0 0
        %466 = vmatmul.mubr.bf16.gmra.mrb[0].mxu0 %v321
        %v467 = vpop.f32.mrb[0].mxu0
        %v468 = vadd.f32 %v273, %v467
        %v469 = vpop.f32.mrb[0].mxu0
        %v470 = vpop.f32.mrb[0].mxu0
        %v471 = vadd.f32 %v273, %v470
        %v472 = vpop.f32.mrb[0].mxu0
        %473 = vmatprep.mubr.bf16.mxu0 0
        %474 = vmatmul.mubr.bf16.gmra.mrb[0].mxu0 %v324
        %v475 = vpop.f32.mrb[0].mxu0
        %v476 = vadd.f32 %v273, %v475
        %v477 = vpop.f32.mrb[0].mxu0
        %v478 = vpop.f32.mrb[0].mxu0
        %v479 = vadd.f32 %v273, %v478
        %v480 = vpop.f32.mrb[0].mxu0
        %481 = vmatprep.mubr.bf16.mxu0 0
        %482 = vmatmul.mubr.bf16.gmra.mrb[0].mxu0 %v327
        %v483 = vpop.f32.mrb[0].mxu0
        %v484 = vadd.f32 %v273, %v483
        %v485 = vpop.f32.mrb[0].mxu0
        %v486 = vpop.f32.mrb[0].mxu0
        %v487 = vadd.f32 %v273, %v486
        %v488 = vpop.f32.mrb[0].mxu0
        %489 = vdwg.mxu0
        %v490 = vmax.f32 %v364, 0.0
        %v491 = vmax.f32 %v367, 0.0
        %v492 = vmax.f32 %v372, 0.0
        %v493 = vmax.f32 %v375, 0.0
        %v494 = vmax.f32 %v380, 0.0
        %v495 = vmax.f32 %v383, 0.0
        %v496 = vmax.f32 %v388, 0.0
        %v497 = vmax.f32 %v391, 0.0
        %v498 = vmax.f32 %v396, 0.0
        %v499 = vmax.f32 %v399, 0.0
        %v500 = vmax.f32 %v404, 0.0
        %v501 = vmax.f32 %v407, 0.0
        %v502 = vmax.f32 %v412, 0.0
        %v503 = vmax.f32 %v415, 0.0
        %v504 = vmax.f32 %v420, 0.0
        %v505 = vmax.f32 %v423, 0.0
        %v506 = vmax.f32 %v428, 0.0
        %v507 = vmax.f32 %v431, 0.0
        %v508 = vmax.f32 %v436, 0.0
        %v509 = vmax.f32 %v439, 0.0
        %v510 = vmax.f32 %v444, 0.0
        %v511 = vmax.f32 %v447, 0.0
        %v512 = vmax.f32 %v452, 0.0
        %v513 = vmax.f32 %v455, 0.0
        %v514 = vmax.f32 %v460, 0.0
        %v515 = vmax.f32 %v463, 0.0
        %v516 = vmax.f32 %v468, 0.0
        %v517 = vmax.f32 %v471, 0.0
        %v518 = vmax.f32 %v476, 0.0
        %v519 = vmax.f32 %v479, 0.0
        %v520 = vmax.f32 %v484, 0.0
        %v521 = vmax.f32 %v487, 0.0
        %v522 = vpack.c.bf16 %v491, %v490
        %v523 = vpack.c.bf16 %v493, %v492
        %v524 = vpack.c.bf16 %v495, %v494
        %v525 = vpack.c.bf16 %v497, %v496
        %v526 = vpack.c.bf16 %v499, %v498
        %v527 = vpack.c.bf16 %v501, %v500
        %v528 = vpack.c.bf16 %v503, %v502
        %v529 = vpack.c.bf16 %v505, %v504
        %v530 = vpack.c.bf16 %v507, %v506
        %v531 = vpack.c.bf16 %v509, %v508
        %v532 = vpack.c.bf16 %v511, %v510
        %v533 = vpack.c.bf16 %v513, %v512
        %v534 = vpack.c.bf16 %v515, %v514
        %v535 = vpack.c.bf16 %v517, %v516
        %v536 = vpack.c.bf16 %v519, %v518
        %v537 = vpack.c.bf16 %v521, %v520
        %v538 = vld [vmem:[%s2] sm:$0xf]
        %v539 = vld [vmem:[%s2 + $0x4] sm:$0xf]
        %v540 = vld [vmem:[%s2 + $0x8] sm:$0xf]
        %v541 = vld [vmem:[%s2 + $0xc] sm:$0xf]
        %v542 = vld [vmem:[%s2 + $0x10] sm:$0xf]
        %v543 = vld [vmem:[%s2 + $0x14] sm:$0xf]
        %v544 = vld [vmem:[%s2 + $0x18] sm:$0xf]
        %v545 = vld [vmem:[%s2 + $0x1c] sm:$0xf]
        %v546 = vld [vmem:[%s2 + $0x20] sm:$0xf]
        %v547 = vld [vmem:[%s2 + $0x24] sm:$0xf]
        %v548 = vld [vmem:[%s2 + $0x28] sm:$0xf]
        %v549 = vld [vmem:[%s2 + $0x2c] sm:$0xf]
        %v550 = vld [vmem:[%s2 + $0x30] sm:$0xf]
        %v551 = vld [vmem:[%s2 + $0x34] sm:$0xf]
        %v552 = vld [vmem:[%s2 + $0x38] sm:$0xf]
        %v553 = vld [vmem:[%s2 + $0x3c] sm:$0xf]
        %v554 = vld [vmem:[%s3 + $0x1] sm:$0x1]
        %v555 = vlaneseq
        %v556 = vshrl.u32 %v555, 7
        %v557 = vsub.s32 0, %v556
        %v558 = vrot.slane %v554, %v557
        %v575 = vunpack.c.l.b16 %v538
        %v576 = vunpack.c.l.b16 %v539
        %v577 = vunpack.c.l.b16 %v540
        %v578 = vunpack.c.l.b16 %v541
        %v579 = vunpack.c.l.b16 %v542
        %v580 = vunpack.c.l.b16 %v543
        %v581 = vunpack.c.l.b16 %v544
        %v582 = vunpack.c.l.b16 %v545
        %v583 = vunpack.c.l.b16 %v546
        %v584 = vunpack.c.l.b16 %v547
        %v585 = vunpack.c.l.b16 %v548
        %v586 = vunpack.c.l.b16 %v549
        %v587 = vunpack.c.l.b16 %v550
        %v588 = vunpack.c.l.b16 %v551
        %v589 = vunpack.c.l.b16 %v552
        %v590 = vunpack.c.l.b16 %v553
        %v591 = vpack.c.b16 %v576, %v575
        %v592 = vpack.c.b16 %v578, %v577
        %v593 = vpack.c.b16 %v580, %v579
        %v594 = vpack.c.b16 %v582, %v581
        %v595 = vpack.c.b16 %v584, %v583
        %v596 = vpack.c.b16 %v586, %v585
        %v597 = vpack.c.b16 %v588, %v587
        %v598 = vpack.c.b16 %v590, %v589
        %607 = vmatprep.subr.bf16.mxu0 0
        %608 = vmatpush1.bf16.msra.mxu0 %v591
        %609 = vmatprep.subr.bf16.mxu0 0
        %610 = vmatpush1.bf16.msra.mxu0 %v592
        %611 = vmatprep.subr.bf16.mxu0 0
        %612 = vmatpush1.bf16.msra.mxu0 %v593
        %613 = vmatprep.subr.bf16.mxu0 0
        %614 = vmatpush1.bf16.msra.mxu0 %v594
        %615 = vmatprep.subr.bf16.mxu0 0
        %616 = vmatpush1.bf16.msra.mxu0 %v595
        %617 = vmatprep.subr.bf16.mxu0 0
        %618 = vmatpush1.bf16.msra.mxu0 %v596
        %619 = vmatprep.subr.bf16.mxu0 0
        %620 = vmatpush1.bf16.msra.mxu0 %v597
        %621 = vmatprep.subr.bf16.mxu0 0
        %622 = vmatpush1.bf16.msra.mxu0 %v598
        %623 = vmatprep.subr.bf16.mxu0 0
        %624 = vmatpush1.bf16.msra.mxu0 0
        %625 = vmatprep.subr.bf16.mxu0 0
        %626 = vmatpush1.bf16.msra.mxu0 0
        %627 = vmatprep.subr.bf16.mxu0 0
        %628 = vmatpush1.bf16.msra.mxu0 0
        %629 = vmatprep.subr.bf16.mxu0 0
        %630 = vmatpush1.bf16.msra.mxu0 0
        %631 = vmatprep.subr.bf16.mxu0 0
        %632 = vmatpush1.bf16.msra.mxu0 0
        %633 = vmatprep.subr.bf16.mxu0 0
        %634 = vmatpush1.bf16.msra.mxu0 0
        %635 = vmatprep.subr.bf16.mxu0 0
        %636 = vmatpush1.bf16.msra.mxu0 0
        %637 = vmatprep.subr.bf16.mxu0 0
        %638 = vmatpush1.bf16.msra.mxu0 0
        %639 = vmatprep.mubr.bf16.mxu0 0
        %640 = vmatmul.mubr.bf16.gmra.mrb[0].mxu0 %v522
        %v641 = vpop.f32.mrb[0].mxu0
        %v642 = vadd.f32 %v558, %v641
        %v643 = vpop.f32.mrb[0].mxu0
        %v644 = vpop.f32.mrb[0].mxu0
        %v645 = vadd.f32 %v558, %v644
        %v646 = vpop.f32.mrb[0].mxu0
        %647 = vmatprep.mubr.bf16.mxu0 0
        %648 = vmatmul.mubr.bf16.gmra.mrb[0].mxu0 %v523
        %v649 = vpop.f32.mrb[0].mxu0
        %v650 = vadd.f32 %v558, %v649
        %v651 = vpop.f32.mrb[0].mxu0
        %v652 = vpop.f32.mrb[0].mxu0
        %v653 = vadd.f32 %v558, %v652
        %v654 = vpop.f32.mrb[0].mxu0
        %655 = vmatprep.mubr.bf16.mxu0 0
        %656 = vmatmul.mubr.bf16.gmra.mrb[0].mxu0 %v524
        %v657 = vpop.f32.mrb[0].mxu0
        %v658 = vadd.f32 %v558, %v657
        %v659 = vpop.f32.mrb[0].mxu0
        %v660 = vpop.f32.mrb[0].mxu0
        %v661 = vadd.f32 %v558, %v660
        %v662 = vpop.f32.mrb[0].mxu0
        %663 = vmatprep.mubr.bf16.mxu0 0
        %664 = vmatmul.mubr.bf16.gmra.mrb[0].mxu0 %v525
        %v665 = vpop.f32.mrb[0].mxu0
        %v666 = vadd.f32 %v558, %v665
        %v667 = vpop.f32.mrb[0].mxu0
        %v668 = vpop.f32.mrb[0].mxu0
        %v669 = vadd.f32 %v558, %v668
        %v670 = vpop.f32.mrb[0].mxu0
        %671 = vmatprep.mubr.bf16.mxu0 0
        %672 = vmatmul.mubr.bf16.gmra.mrb[0].mxu0 %v526
        %v673 = vpop.f32.mrb[0].mxu0
        %v674 = vadd.f32 %v558, %v673
        %v675 = vpop.f32.mrb[0].mxu0
        %v676 = vpop.f32.mrb[0].mxu0
        %v677 = vadd.f32 %v558, %v676
        %v678 = vpop.f32.mrb[0].mxu0
        %679 = vmatprep.mubr.bf16.mxu0 0
        %680 = vmatmul.mubr.bf16.gmra.mrb[0].mxu0 %v527
        %v681 = vpop.f32.mrb[0].mxu0
        %v682 = vadd.f32 %v558, %v681
        %v683 = vpop.f32.mrb[0].mxu0
        %v684 = vpop.f32.mrb[0].mxu0
        %v685 = vadd.f32 %v558, %v684
        %v686 = vpop.f32.mrb[0].mxu0
        %687 = vmatprep.mubr.bf16.mxu0 0
        %688 = vmatmul.mubr.bf16.gmra.mrb[0].mxu0 %v528
        %v689 = vpop.f32.mrb[0].mxu0
        %v690 = vadd.f32 %v558, %v689
        %v691 = vpop.f32.mrb[0].mxu0
        %v692 = vpop.f32.mrb[0].mxu0
        %v693 = vadd.f32 %v558, %v692
        %v694 = vpop.f32.mrb[0].mxu0
        %695 = vmatprep.mubr.bf16.mxu0 0
        %696 = vmatmul.mubr.bf16.gmra.mrb[0].mxu0 %v529
        %v697 = vpop.f32.mrb[0].mxu0
        %v698 = vadd.f32 %v558, %v697
        %v699 = vpop.f32.mrb[0].mxu0
        %v700 = vpop.f32.mrb[0].mxu0
        %v701 = vadd.f32 %v558, %v700
        %v702 = vpop.f32.mrb[0].mxu0
        %703 = vmatprep.mubr.bf16.mxu0 0
        %704 = vmatmul.mubr.bf16.gmra.mrb[0].mxu0 %v530
        %v705 = vpop.f32.mrb[0].mxu0
        %v706 = vadd.f32 %v558, %v705
        %v707 = vpop.f32.mrb[0].mxu0
        %v708 = vpop.f32.mrb[0].mxu0
        %v709 = vadd.f32 %v558, %v708
        %v710 = vpop.f32.mrb[0].mxu0
        %711 = vmatprep.mubr.bf16.mxu0 0
        %712 = vmatmul.mubr.bf16.gmra.mrb[0].mxu0 %v531
        %v713 = vpop.f32.mrb[0].mxu0
        %v714 = vadd.f32 %v558, %v713
        %v715 = vpop.f32.mrb[0].mxu0
        %v716 = vpop.f32.mrb[0].mxu0
        %v717 = vadd.f32 %v558, %v716
        %v718 = vpop.f32.mrb[0].mxu0
        %719 = vmatprep.mubr.bf16.mxu0 0
        %720 = vmatmul.mubr.bf16.gmra.mrb[0].mxu0 %v532
        %v721 = vpop.f32.mrb[0].mxu0
        %v722 = vadd.f32 %v558, %v721
        %v723 = vpop.f32.mrb[0].mxu0
        %v724 = vpop.f32.mrb[0].mxu0
        %v725 = vadd.f32 %v558, %v724
        %v726 = vpop.f32.mrb[0].mxu0
        %727 = vmatprep.mubr.bf16.mxu0 0
        %728 = vmatmul.mubr.bf16.gmra.mrb[0].mxu0 %v533
        %v729 = vpop.f32.mrb[0].mxu0
        %v730 = vadd.f32 %v558, %v729
        %v731 = vpop.f32.mrb[0].mxu0
        %v732 = vpop.f32.mrb[0].mxu0
        %v733 = vadd.f32 %v558, %v732
        %v734 = vpop.f32.mrb[0].mxu0
        %735 = vmatprep.mubr.bf16.mxu0 0
        %736 = vmatmul.mubr.bf16.gmra.mrb[0].mxu0 %v534
        %v737 = vpop.f32.mrb[0].mxu0
        %v738 = vadd.f32 %v558, %v737
        %v739 = vpop.f32.mrb[0].mxu0
        %v740 = vpop.f32.mrb[0].mxu0
        %v741 = vadd.f32 %v558, %v740
        %v742 = vpop.f32.mrb[0].mxu0
        %743 = vmatprep.mubr.bf16.mxu0 0
        %744 = vmatmul.mubr.bf16.gmra.mrb[0].mxu0 %v535
        %v745 = vpop.f32.mrb[0].mxu0
        %v746 = vadd.f32 %v558, %v745
        %v747 = vpop.f32.mrb[0].mxu0
        %v748 = vpop.f32.mrb[0].mxu0
        %v749 = vadd.f32 %v558, %v748
        %v750 = vpop.f32.mrb[0].mxu0
        %751 = vmatprep.mubr.bf16.mxu0 0
        %752 = vmatmul.mubr.bf16.gmra.mrb[0].mxu0 %v536
        %v753 = vpop.f32.mrb[0].mxu0
        %v754 = vadd.f32 %v558, %v753
        %v755 = vpop.f32.mrb[0].mxu0
        %v756 = vpop.f32.mrb[0].mxu0
        %v757 = vadd.f32 %v558, %v756
        %v758 = vpop.f32.mrb[0].mxu0
        %759 = vmatprep.mubr.bf16.mxu0 0
        %760 = vmatmul.mubr.bf16.gmra.mrb[0].mxu0 %v537
        %v761 = vpop.f32.mrb[0].mxu0
        %v762 = vadd.f32 %v558, %v761
        %v763 = vpop.f32.mrb[0].mxu0
        %v764 = vpop.f32.mrb[0].mxu0
        %v765 = vadd.f32 %v558, %v764
        %v766 = vpop.f32.mrb[0].mxu0
        %767 = vdwg.mxu0
        %v768 = vmax.f32 %v642, 0.0
        %v769 = vmax.f32 %v645, 0.0
        %v770 = vmax.f32 %v650, 0.0
        %v771 = vmax.f32 %v653, 0.0
        %v772 = vmax.f32 %v658, 0.0
        %v773 = vmax.f32 %v661, 0.0
        %v774 = vmax.f32 %v666, 0.0
        %v775 = vmax.f32 %v669, 0.0
        %v776 = vmax.f32 %v674, 0.0
        %v777 = vmax.f32 %v677, 0.0
        %v778 = vmax.f32 %v682, 0.0
        %v779 = vmax.f32 %v685, 0.0
        %v780 = vmax.f32 %v690, 0.0
        %v781 = vmax.f32 %v693, 0.0
        %v782 = vmax.f32 %v698, 0.0
        %v783 = vmax.f32 %v701, 0.0
        %v784 = vmax.f32 %v706, 0.0
        %v785 = vmax.f32 %v709, 0.0
        %v786 = vmax.f32 %v714, 0.0
        %v787 = vmax.f32 %v717, 0.0
        %v788 = vmax.f32 %v722, 0.0
        %v789 = vmax.f32 %v725, 0.0
        %v790 = vmax.f32 %v730, 0.0
        %v791 = vmax.f32 %v733, 0.0
        %v792 = vmax.f32 %v738, 0.0
        %v793 = vmax.f32 %v741, 0.0
        %v794 = vmax.f32 %v746, 0.0
        %v795 = vmax.f32 %v749, 0.0
        %v796 = vmax.f32 %v754, 0.0
        %v797 = vmax.f32 %v757, 0.0
        %v798 = vmax.f32 %v762, 0.0
        %v799 = vmax.f32 %v765, 0.0
        %v800 = vld [vmem:[%s3 + $0x2] sm:$0x1]
        %v801 = vlaneseq
        %v802 = vshrl.u32 %v801, 7
        %v803 = vsub.s32 0, %v802
        %v804 = vrot.slane %v800, %v803
        %v805 = vmul.f32 %v768, %v804
        %v806 = vmul.f32 %v769, %v804
        %v807 = vmul.f32 %v770, %v804
        %v808 = vmul.f32 %v771, %v804
        %v809 = vmul.f32 %v772, %v804
        %v810 = vmul.f32 %v773, %v804
        %v811 = vmul.f32 %v774, %v804
        %v812 = vmul.f32 %v775, %v804
        %v813 = vmul.f32 %v776, %v804
        %v814 = vmul.f32 %v777, %v804
        %v815 = vmul.f32 %v778, %v804
        %v816 = vmul.f32 %v779, %v804
        %v817 = vmul.f32 %v780, %v804
        %v818 = vmul.f32 %v781, %v804
        %v819 = vmul.f32 %v782, %v804
        %v820 = vmul.f32 %v783, %v804
        %v821 = vmul.f32 %v784, %v804
        %v822 = vmul.f32 %v785, %v804
        %v823 = vmul.f32 %v786, %v804
        %v824 = vmul.f32 %v787, %v804
        %v825 = vmul.f32 %v788, %v804
        %v826 = vmul.f32 %v789, %v804
        %v827 = vmul.f32 %v790, %v804
        %v828 = vmul.f32 %v791, %v804
        %v829 = vmul.f32 %v792, %v804
        %v830 = vmul.f32 %v793, %v804
        %v831 = vmul.f32 %v794, %v804
        %v832 = vmul.f32 %v795, %v804
        %v833 = vmul.f32 %v796, %v804
        %v834 = vmul.f32 %v797, %v804
        %v835 = vmul.f32 %v798, %v804
        %v836 = vmul.f32 %v799, %v804
        %837 = vadd.xlane.f32.xlu0 %v805
        %v838 = vpop.xlane.xlu0 %837
        %839 = vadd.xlane.f32.xlu0 %v806
        %v840 = vpop.xlane.xlu0 %839
        %841 = vadd.xlane.f32.xlu0 %v807
        %v842 = vpop.xlane.xlu0 %841
        %843 = vadd.xlane.f32.xlu0 %v808
        %v844 = vpop.xlane.xlu0 %843
        %845 = vadd.xlane.f32.xlu0 %v809
        %v846 = vpop.xlane.xlu0 %845
        %847 = vadd.xlane.f32.xlu0 %v810
        %v848 = vpop.xlane.xlu0 %847
        %849 = vadd.xlane.f32.xlu0 %v811
        %v850 = vpop.xlane.xlu0 %849
        %851 = vadd.xlane.f32.xlu0 %v812
        %v852 = vpop.xlane.xlu0 %851
        %853 = vadd.xlane.f32.xlu0 %v813
        %v854 = vpop.xlane.xlu0 %853
        %855 = vadd.xlane.f32.xlu0 %v814
        %v856 = vpop.xlane.xlu0 %855
        %857 = vadd.xlane.f32.xlu0 %v815
        %v858 = vpop.xlane.xlu0 %857
        %859 = vadd.xlane.f32.xlu0 %v816
        %v860 = vpop.xlane.xlu0 %859
        %861 = vadd.xlane.f32.xlu0 %v817
        %v862 = vpop.xlane.xlu0 %861
        %863 = vadd.xlane.f32.xlu0 %v818
        %v864 = vpop.xlane.xlu0 %863
        %865 = vadd.xlane.f32.xlu0 %v819
        %v866 = vpop.xlane.xlu0 %865
        %867 = vadd.xlane.f32.xlu0 %v820
        %v868 = vpop.xlane.xlu0 %867
        %869 = vadd.xlane.f32.xlu0 %v821
        %v870 = vpop.xlane.xlu0 %869
        %871 = vadd.xlane.f32.xlu0 %v822
        %v872 = vpop.xlane.xlu0 %871
        %873 = vadd.xlane.f32.xlu0 %v823
        %v874 = vpop.xlane.xlu0 %873
        %875 = vadd.xlane.f32.xlu0 %v824
        %v876 = vpop.xlane.xlu0 %875
        %877 = vadd.xlane.f32.xlu0 %v825
        %v878 = vpop.xlane.xlu0 %877
        %879 = vadd.xlane.f32.xlu0 %v826
        %v880 = vpop.xlane.xlu0 %879
        %881 = vadd.xlane.f32.xlu0 %v827
        %v882 = vpop.xlane.xlu0 %881
        %883 = vadd.xlane.f32.xlu0 %v828
        %v884 = vpop.xlane.xlu0 %883
        %885 = vadd.xlane.f32.xlu0 %v829
        %v886 = vpop.xlane.xlu0 %885
        %887 = vadd.xlane.f32.xlu0 %v830
        %v888 = vpop.xlane.xlu0 %887
        %889 = vadd.xlane.f32.xlu0 %v831
        %v890 = vpop.xlane.xlu0 %889
        %891 = vadd.xlane.f32.xlu0 %v832
        %v892 = vpop.xlane.xlu0 %891
        %893 = vadd.xlane.f32.xlu0 %v833
        %v894 = vpop.xlane.xlu0 %893
        %895 = vadd.xlane.f32.xlu0 %v834
        %v896 = vpop.xlane.xlu0 %895
        %897 = vadd.xlane.f32.xlu0 %v835
        %v898 = vpop.xlane.xlu0 %897
        %899 = vadd.xlane.f32.xlu0 %v836
        %v900 = vpop.xlane.xlu0 %899
        %v901 = vld [vmem:[%s3 + $0x3] sm:$0x1]
        %s903 = vtos %v901
        %v904 = vstv %s903
        %v906 = vadd.f32 %v838, %v904
        %v907 = vadd.f32 %v840, %v904
        %v908 = vadd.f32 %v842, %v904
        %v909 = vadd.f32 %v844, %v904
        %v910 = vadd.f32 %v846, %v904
        %v911 = vadd.f32 %v848, %v904
        %v912 = vadd.f32 %v850, %v904
        %v913 = vadd.f32 %v852, %v904
        %v914 = vadd.f32 %v854, %v904
        %v915 = vadd.f32 %v856, %v904
        %v916 = vadd.f32 %v858, %v904
        %v917 = vadd.f32 %v860, %v904
        %v918 = vadd.f32 %v862, %v904
        %v919 = vadd.f32 %v864, %v904
        %v920 = vadd.f32 %v866, %v904
        %v921 = vadd.f32 %v868, %v904
        %v922 = vadd.f32 %v870, %v904
        %v923 = vadd.f32 %v872, %v904
        %v924 = vadd.f32 %v874, %v904
        %v925 = vadd.f32 %v876, %v904
        %v926 = vadd.f32 %v878, %v904
        %v927 = vadd.f32 %v880, %v904
        %v928 = vadd.f32 %v882, %v904
        %v929 = vadd.f32 %v884, %v904
        %v930 = vadd.f32 %v886, %v904
        %v931 = vadd.f32 %v888, %v904
        %v932 = vadd.f32 %v890, %v904
        %v933 = vadd.f32 %v892, %v904
        %v934 = vadd.f32 %v894, %v904
        %v935 = vadd.f32 %v896, %v904
        %v936 = vadd.f32 %v898, %v904
        %v937 = vadd.f32 %v900, %v904
        %v970 = vlaneseq
        %v971 = vand.u32 %v970, 127
        %v972 = vlaneseq
        %v973 = vshrl.u32 %v972, 7
        %v974 = vsub.s32 %v971, %v973
        %v975 = vrot.slane %v906, %v974
        %v976 = vadd.s32 %v971, 4294967288
        %v977 = vlaneseq
        %v978 = vshrl.u32 %v977, 7
        %v979 = vsub.s32 %v976, %v978
        %v980 = vrot.slane %v907, %v979
        %vm981 = vcmask 130112
        %v982 = vsel %vm981, %v980, %v975
        %v983 = vadd.s32 %v971, 4294967280
        %v984 = vlaneseq
        %v985 = vshrl.u32 %v984, 7
        %v986 = vsub.s32 %v983, %v985
        %v987 = vrot.slane %v908, %v986
        %vm988 = vcmask 195712
        %v989 = vsel %vm988, %v987, %v982
        %v990 = vadd.s32 %v971, 4294967272
        %v991 = vlaneseq
        %v992 = vshrl.u32 %v991, 7
        %v993 = vsub.s32 %v990, %v992
        %v994 = vrot.slane %v909, %v993
        %vm995 = vcmask 261312
        %v996 = vsel %vm995, %v994, %v989
        %v997 = vadd.s32 %v971, 4294967264
        %v998 = vlaneseq
        %v999 = vshrl.u32 %v998, 7
        %v1000 = vsub.s32 %v997, %v999
        %v1001 = vrot.slane %v910, %v1000
        %vm1002 = vcmask 326912
        %v1003 = vsel %vm1002, %v1001, %v996
        %v1004 = vadd.s32 %v971, 4294967256
        %v1005 = vlaneseq
        %v1006 = vshrl.u32 %v1005, 7
        %v1007 = vsub.s32 %v1004, %v1006
        %v1008 = vrot.slane %v911, %v1007
        %vm1009 = vcmask 392512
        %v1010 = vsel %vm1009, %v1008, %v1003
        %v1011 = vadd.s32 %v971, 4294967248
        %v1012 = vlaneseq
        %v1013 = vshrl.u32 %v1012, 7
        %v1014 = vsub.s32 %v1011, %v1013
        %v1015 = vrot.slane %v912, %v1014
        %vm1016 = vcmask 458112
        %v1017 = vsel %vm1016, %v1015, %v1010
        %v1018 = vadd.s32 %v971, 4294967240
        %v1019 = vlaneseq
        %v1020 = vshrl.u32 %v1019, 7
        %v1021 = vsub.s32 %v1018, %v1020
        %v1022 = vrot.slane %v913, %v1021
        %vm1023 = vcmask 523712
        %v1024 = vsel %vm1023, %v1022, %v1017
        %v1025 = vadd.s32 %v971, 4294967232
        %v1026 = vlaneseq
        %v1027 = vshrl.u32 %v1026, 7
        %v1028 = vsub.s32 %v1025, %v1027
        %v1029 = vrot.slane %v914, %v1028
        %vm1030 = vcmask 589312
        %v1031 = vsel %vm1030, %v1029, %v1024
        %v1032 = vadd.s32 %v971, 4294967224
        %v1033 = vlaneseq
        %v1034 = vshrl.u32 %v1033, 7
        %v1035 = vsub.s32 %v1032, %v1034
        %v1036 = vrot.slane %v915, %v1035
        %vm1037 = vcmask 654912
        %v1038 = vsel %vm1037, %v1036, %v1031
        %v1039 = vadd.s32 %v971, 4294967216
        %v1040 = vlaneseq
        %v1041 = vshrl.u32 %v1040, 7
        %v1042 = vsub.s32 %v1039, %v1041
        %v1043 = vrot.slane %v916, %v1042
        %vm1044 = vcmask 720512
        %v1045 = vsel %vm1044, %v1043, %v1038
        %v1046 = vadd.s32 %v971, 4294967208
        %v1047 = vlaneseq
        %v1048 = vshrl.u32 %v1047, 7
        %v1049 = vsub.s32 %v1046, %v1048
        %v1050 = vrot.slane %v917, %v1049
        %vm1051 = vcmask 786112
        %v1052 = vsel %vm1051, %v1050, %v1045
        %v1053 = vadd.s32 %v971, 4294967200
        %v1054 = vlaneseq
        %v1055 = vshrl.u32 %v1054, 7
        %v1056 = vsub.s32 %v1053, %v1055
        %v1057 = vrot.slane %v918, %v1056
        %vm1058 = vcmask 851712
        %v1059 = vsel %vm1058, %v1057, %v1052
        %v1060 = vadd.s32 %v971, 4294967192
        %v1061 = vlaneseq
        %v1062 = vshrl.u32 %v1061, 7
        %v1063 = vsub.s32 %v1060, %v1062
        %v1064 = vrot.slane %v919, %v1063
        %vm1065 = vcmask 917312
        %v1066 = vsel %vm1065, %v1064, %v1059
        %v1067 = vadd.s32 %v971, 4294967184
        %v1068 = vlaneseq
        %v1069 = vshrl.u32 %v1068, 7
        %v1070 = vsub.s32 %v1067, %v1069
        %v1071 = vrot.slane %v920, %v1070
        %vm1072 = vcmask 982912
        %v1073 = vsel %vm1072, %v1071, %v1066
        %v1074 = vadd.s32 %v971, 4294967176
        %v1075 = vlaneseq
        %v1076 = vshrl.u32 %v1075, 7
        %v1077 = vsub.s32 %v1074, %v1076
        %v1078 = vrot.slane %v921, %v1077
        %vm1079 = vcmask 1048512
        %v1080 = vsel %vm1079, %v1078, %v1073
        %v1081 = vlaneseq
        %v1082 = vshrl.u32 %v1081, 7
        %v1083 = vsub.s32 %v971, %v1082
        %v1084 = vrot.slane %v922, %v1083
        %v1085 = vlaneseq
        %v1086 = vshrl.u32 %v1085, 7
        %v1087 = vsub.s32 %v976, %v1086
        %v1088 = vrot.slane %v923, %v1087
        %v1089 = vsel %vm981, %v1088, %v1084
        %v1090 = vlaneseq
        %v1091 = vshrl.u32 %v1090, 7
        %v1092 = vsub.s32 %v983, %v1091
        %v1093 = vrot.slane %v924, %v1092
        %v1094 = vsel %vm988, %v1093, %v1089
        %v1095 = vlaneseq
        %v1096 = vshrl.u32 %v1095, 7
        %v1097 = vsub.s32 %v990, %v1096
        %v1098 = vrot.slane %v925, %v1097
        %v1099 = vsel %vm995, %v1098, %v1094
        %v1100 = vlaneseq
        %v1101 = vshrl.u32 %v1100, 7
        %v1102 = vsub.s32 %v997, %v1101
        %v1103 = vrot.slane %v926, %v1102
        %v1104 = vsel %vm1002, %v1103, %v1099
        %v1105 = vlaneseq
        %v1106 = vshrl.u32 %v1105, 7
        %v1107 = vsub.s32 %v1004, %v1106
        %v1108 = vrot.slane %v927, %v1107
        %v1109 = vsel %vm1009, %v1108, %v1104
        %v1110 = vlaneseq
        %v1111 = vshrl.u32 %v1110, 7
        %v1112 = vsub.s32 %v1011, %v1111
        %v1113 = vrot.slane %v928, %v1112
        %v1114 = vsel %vm1016, %v1113, %v1109
        %v1115 = vlaneseq
        %v1116 = vshrl.u32 %v1115, 7
        %v1117 = vsub.s32 %v1018, %v1116
        %v1118 = vrot.slane %v929, %v1117
        %v1119 = vsel %vm1023, %v1118, %v1114
        %v1120 = vlaneseq
        %v1121 = vshrl.u32 %v1120, 7
        %v1122 = vsub.s32 %v1025, %v1121
        %v1123 = vrot.slane %v930, %v1122
        %v1124 = vsel %vm1030, %v1123, %v1119
        %v1125 = vlaneseq
        %v1126 = vshrl.u32 %v1125, 7
        %v1127 = vsub.s32 %v1032, %v1126
        %v1128 = vrot.slane %v931, %v1127
        %v1129 = vsel %vm1037, %v1128, %v1124
        %v1130 = vlaneseq
        %v1131 = vshrl.u32 %v1130, 7
        %v1132 = vsub.s32 %v1039, %v1131
        %v1133 = vrot.slane %v932, %v1132
        %v1134 = vsel %vm1044, %v1133, %v1129
        %v1135 = vlaneseq
        %v1136 = vshrl.u32 %v1135, 7
        %v1137 = vsub.s32 %v1046, %v1136
        %v1138 = vrot.slane %v933, %v1137
        %v1139 = vsel %vm1051, %v1138, %v1134
        %v1140 = vlaneseq
        %v1141 = vshrl.u32 %v1140, 7
        %v1142 = vsub.s32 %v1053, %v1141
        %v1143 = vrot.slane %v934, %v1142
        %v1144 = vsel %vm1058, %v1143, %v1139
        %v1145 = vlaneseq
        %v1146 = vshrl.u32 %v1145, 7
        %v1147 = vsub.s32 %v1060, %v1146
        %v1148 = vrot.slane %v935, %v1147
        %v1149 = vsel %vm1065, %v1148, %v1144
        %v1150 = vlaneseq
        %v1151 = vshrl.u32 %v1150, 7
        %v1152 = vsub.s32 %v1067, %v1151
        %v1153 = vrot.slane %v936, %v1152
        %v1154 = vsel %vm1072, %v1153, %v1149
        %v1155 = vlaneseq
        %v1156 = vshrl.u32 %v1155, 7
        %v1157 = vsub.s32 %v1074, %v1156
        %v1158 = vrot.slane %v937, %v1157
        %v1159 = vsel %vm1079, %v1158, %v1154
        %vm1160 = vcmask 1041409
        %v1161 = vsel %vm1160, %v1159, %v1080
        %1163 = vst [vmem:[%s203] sm:$0x3] %v1161
        %s1164 = sand.u32 %s115, 1
        %s1165 = scalar_lea.sflag [#allocation3], %s1164
        %s1166 = sand.u32 %s115, 1
        %s1167 = smul.addr %s1166, 2
        %s1168 = scalar_lea.vmem [#allocation2], %s1167
        // Predicated region
        $region37: #{tpu_custom_call.1} parent=35 // pred_check
          %p1169 = pneg %p125
        $region38: #{tpu_custom_call.1} parent=35 // pred_check_branch
          %1171 = sbr.rel (%p1169) target = $region40
        $region39: #{tpu_custom_call.1} parent=35 // pred_region
          %s1173 = ssub.s32 32, 32
          %1174 = vsyncadd %s1165, %s1173
          %s1175 = smul.addr %s18, 32
          %s1176 = scalar_lea.hbm %s4, %s1175
          %s1178 = sshll.u32 %s1168, 4
          %s1179 = int_to_ptr.vmem [resolvable:$true] %s1178
          %1181 = dma.vmem_to_hbm [thread:$0]  %s1179, 32, %s1176, %s1165
        $region40: #{tpu_custom_call.1} parent=35 // pred_fallthru
          _
      $region36: #{tpu_custom_call.1} parent=5 // pred_fallthru
        _
      %p1182 = scmp.le.s32.totalorder 2, %s13
      // Predicated region
      $region41: #{tpu_custom_call.1} parent=5 // pred_check
        %p1183 = pneg %p1182
      $region42: #{tpu_custom_call.1} parent=5 // pred_check_branch
        %1185 = sbr.rel (%p1183) target = $region44
      $region43: #{tpu_custom_call.1} parent=5 // pred_region
        %s1186 = ssub.s32 %s13, 2
        // Predicated region
        $region45: #{tpu_custom_call.1} parent=43 // pred_check
          %p1187 = pneg %p131
        $region46: #{tpu_custom_call.1} parent=43 // pred_check_branch
          %1189 = sbr.rel (%p1187) target = $region48
        $region47: #{tpu_custom_call.1} parent=43 // pred_region
          %s1190 = sand.u32 %s116, 1
          %s1191 = scalar_lea.sflag [#allocation3], %s1190
          %s1192 = sand.u32 %s116, 1
          %s1193 = smul.addr %s1192, 2
          %s1194 = scalar_lea.vmem [#allocation2], %s1193
          %1195 = dma.done %s1191, 32
        $region48: #{tpu_custom_call.1} parent=43 // pred_fallthru
          _
      $region44: #{tpu_custom_call.1} parent=5 // pred_fallthru
        _
    $region6: #{tpu_custom_call.1} parent=1 // loop_footer
      %s17 = sadd.s32 1, %s13
    $region7: #{tpu_custom_call.1} parent=1 // loop_footer_branch
      %12 = sbr.rel target = $region3
    $region8: #{tpu_custom_call.1} parent=1 // loop_exit
      _
    %1196 = vsyncpa [#allocation3], 1
    %s1197 = scalar_lea.sflag [#allocation3], 1
    %1198 = vsyncpa %s1197, 1

</llo_original>
